<compile_context>
chip_gen: v5e
topology: v5e:2x2
jax: 0.10.0
libtpu: 0.0.40
codegen_flags: <defaults>
</compile_context>

<pallas_src>
import functools
import math

import jax
import jax.numpy as jnp
from jax.experimental import pallas as pl
from jax.experimental.pallas import tpu as pltpu


def build_positional_encoding(embedding_dim: int, max_seq_length: int) -> jnp.ndarray:
    """Exact replica of the module's __init__ pe buffer (float32, shape [1, L, D])."""
    pos = jnp.arange(max_seq_length, dtype=jnp.float32)[:, None]          # [L, 1]
    i = jnp.arange(0, embedding_dim, 2, dtype=jnp.float32)[None, :]       # [1, D//2]
    # sin term uses exponent 2*i / D ; cos term uses (2*i + 1) / D (module quirk)
    sin_vals = jnp.sin(pos / jnp.power(10000.0, 2.0 * i / embedding_dim))
    cos_vals = jnp.cos(pos / jnp.power(10000.0, (2.0 * i + 1.0) / embedding_dim))
    pe = jnp.zeros((max_seq_length, embedding_dim), dtype=jnp.float32)
    pe = pe.at[:, 0::2].set(sin_vals)
    pe = pe.at[:, 1::2].set(cos_vals)
    return pe[None, :, :]                                                  # [1, L, D]


def _pos_enc_kernel(x_ref, pe_ref, o_ref, *, scale):
    # Rank-matched (1, ct, lane) VMEM tiles: pure VPU scale+add. pe is f32;
    # compute in f32 (torch keeps pe as float32) and cast only on the store.
    x = x_ref[...].astype(jnp.float32)
    o_ref[...] = (x * scale + pe_ref[...]).astype(o_ref.dtype)


def _pick_row_tile(n_chunks: int, lane: int, x_itemsize: int, batch: int) -> int:
    """Row-tile size (trace-time Python; all args are static ints)."""
    # Min sublane multiple: bf16/f16 pack 2 rows/sublane, int8/fp8 pack 4.
    sub = {1: 32, 2: 16}.get(x_itemsize, 8)
    # Per-row VMEM footprint: double-buffered x + out (x dtype) + pe (f32).
    row_bytes = lane * (2 * x_itemsize + 2 * x_itemsize + 2 * 4)
    vmem_budget = 32 * 1024 * 1024
    max_rows = max(1, vmem_budget // row_bytes)
    cap = min(n_chunks, 1024, max_rows)          # 512-1024 = measured roofline sweet spot
    # v7x: keep >= 2 grid blocks along a parallel axis so both TensorCores work.
    if batch == 1 and n_chunks > 1:
        cap = min(cap, pl.cdiv(n_chunks, 2))
    if cap >= n_chunks:
        return n_chunks                          # one full-extent block
    cap = max(sub, (cap // sub) * sub)
    # Prefer an exact divisor of n_chunks (no ragged tail -> no masked stores).
    for cand in range(cap, sub - 1, -sub):
        if n_chunks % cand == 0:
            return cand
    return min(cap, n_chunks)                    # ragged tail: Pallas pads/masks


@jax.jit
def positional_encoder_forward(x: jnp.ndarray, pe: jnp.ndarray) -> jnp.ndarray:
    """x: [B, S, D], pe: [1, L, D] (float32) with L >= S. Returns [B, S, D]."""
    B, S, D = x.shape
    scale = math.sqrt(float(D))
    pe_s = pe[0, :S, :]                          # stay float32; add done in f32

    # ---- pick a lane-dense view ------------------------------------------------
    flat = S * D
    if D % 128 != 0 and flat % 128 == 0:
        # Fold (s, d) into lanes: largest multiple-of-128 divisor of S*D (capped)
        # -> unmasked full-width stores even when D is not a multiple of 128.
        lane = min(flat, 4096)
        lane -= lane % 128
        while flat % lane != 0:                  # terminates at 128
            lane -= 128
    else:
        lane = D                                 # D itself is the full last dim
    n_chunks = flat // lane

    xv = x.reshape(B, n_chunks, lane)
    pev = pe_s.reshape(1, n_chunks, lane)

    # ---- row tile & grid ---------------------------------------------------------
    itemsize = jnp.dtype(x.dtype).itemsize
    ct = _pick_row_tile(n_chunks, lane, itemsize, B)
    n_tiles = pl.cdiv(n_chunks, ct)
    # Chunk axis OUTER, batch INNER: pe's block index is unchanged across the
    # inner (batch) steps, so Pallas skips its re-DMA and pe is read from HBM
    # once per chunk tile (S*D bytes total), not once per (batch, chunk).
    grid = (n_tiles, B)

    kernel = functools.partial(_pos_enc_kernel, scale=scale)

    out = pl.pallas_call(
        kernel,
        out_shape=jax.ShapeDtypeStruct((B, n_chunks, lane), x.dtype),
        grid_spec=pltpu.PrefetchScalarGridSpec(
            num_scalar_prefetch=0,
            grid=grid,
            in_specs=[
                pl.BlockSpec((1, ct, lane), lambda c, b: (b, c, 0)),   # x row tile
                pl.BlockSpec((1, ct, lane), lambda c, b: (0, c, 0)),   # pe: batch-invariant
            ],
            out_specs=pl.BlockSpec((1, ct, lane), lambda c, b: (b, c, 0)),
        ),
        compiler_params=pltpu.CompilerParams(
            dimension_semantics=("parallel", "parallel"),
            vmem_limit_bytes=48 * 1024 * 1024,   # above scoped defaults, below
                                                 # v7x's 64 MiB physical VMEM
        ),
        # input_output_aliases={0: 0} would let callers that discard x reuse its
        # HBM buffer; kept off to preserve the module's out-of-place semantics.
    )(xv, pev)
    return out.reshape(B, S, D)
    # TODO(synk): training-mode dropout (nn.Dropout(0.1)) omitted — eval-mode
    # identity; in-kernel PRNG dropout cannot bit-match torch's RNG anyway.


if __name__ == "__main__":
    embedding_dim = 32
    max_seq_length = 64
    batch, seq = 2, 8

    key = jax.random.PRNGKey(0)
    x = jax.random.normal(key, (batch, seq, embedding_dim), dtype=jnp.float32)

    pe = build_positional_encoding(embedding_dim, max_seq_length)

    out = positional_encoder_forward(x, pe)
    out = jax.block_until_ready(out)

    # Reference check in plain JAX (eval-mode dropout = identity).
    ref = x * math.sqrt(embedding_dim) + pe[:, :seq]
    assert out.shape == (batch, seq, embedding_dim)
    assert jnp.allclose(out, ref, atol=1e-5, rtol=1e-5)

    print("KERNEL_OK")
</pallas_src>

<mosaic_0001>
module attributes {stable_mosaic.version = 11 : i64} {
  func.func @_pos_enc_kernel(%arg0: i32, %arg1: i32, %arg2: memref<1x1x256xf32, #tpu.memory_space<vmem>>, %arg3: memref<1x1x256xf32, #tpu.memory_space<vmem>>, %arg4: memref<1x1x256xf32, #tpu.memory_space<vmem>>) attributes {dimension_semantics = [#tpu.dimension_semantics<parallel>, #tpu.dimension_semantics<parallel>], iteration_bounds = array<i64: 1, 2>, scalar_prefetch = 0 : i64, scratch_operands = 0 : i64, tpu.core_type = #tpu.core_type<tc>, window_params = [{transform_indices = @transform_0, window_bounds = array<i64: 1, 1, 256>}, {transform_indices = @transform_1, window_bounds = array<i64: 1, 1, 256>}, {transform_indices = @transform_2, window_bounds = array<i64: 1, 1, 256>}]} {
    %c0 = arith.constant 0 : index
    %c0_0 = arith.constant 0 : index
    %c0_1 = arith.constant 0 : index
    %0 = vector.load %arg2[%c0, %c0_0, %c0_1] : memref<1x1x256xf32, #tpu.memory_space<vmem>>, vector<1x1x256xf32>
    %cst = arith.constant 5.65685415 : f32
    %1 = vector.broadcast %cst : f32 to vector<1x1x256xf32>
    %2 = arith.mulf %0, %1 : vector<1x1x256xf32>
    %c0_2 = arith.constant 0 : index
    %c0_3 = arith.constant 0 : index
    %c0_4 = arith.constant 0 : index
    %3 = vector.load %arg3[%c0_2, %c0_3, %c0_4] : memref<1x1x256xf32, #tpu.memory_space<vmem>>, vector<1x1x256xf32>
    %4 = arith.addf %2, %3 : vector<1x1x256xf32>
    %c0_5 = arith.constant 0 : index
    %c0_6 = arith.constant 0 : index
    %c0_7 = arith.constant 0 : index
    %5 = vector.load %arg4[%c0_5, %c0_6, %c0_7] : memref<1x1x256xf32, #tpu.memory_space<vmem>>, vector<1x1x256xf32>
    tpu.vector_store %arg4[%c0_5, %c0_6, %c0_7], %4 {strides = array<i32>} : memref<1x1x256xf32, #tpu.memory_space<vmem>>, vector<1x1x256xf32>,
    return
  }
  func.func @transform_0(%arg0: i32, %arg1: i32) -> (i32, i32, i32) {
    %c0_i32 = arith.constant 0 : i32
    %c0_i32_0 = arith.constant 0 : i32
    return %arg1, %arg0, %c0_i32 : i32, i32, i32
  }
  func.func @transform_1(%arg0: i32, %arg1: i32) -> (i32, i32, i32) {
    %c0_i32 = arith.constant 0 : i32
    %c0_i32_0 = arith.constant 0 : i32
    %c0_i32_1 = arith.constant 0 : i32
    return %c0_i32, %arg0, %c0_i32_0 : i32, i32, i32
  }
  func.func @transform_2(%arg0: i32, %arg1: i32) -> (i32, i32, i32) {
    %c0_i32 = arith.constant 0 : i32
    %c0_i32_0 = arith.constant 0 : i32
    return %arg1, %arg0, %c0_i32 : i32, i32, i32
  }
}

</mosaic_0001>

<llo_original>
// kernel: squeeze.1
$region0: #{squeeze.1}
  %s0 = inlined_call_operand.vmem [shape: f32[1,8,32], index: 0, kind: input, shape index: {}]
  %s1 = inlined_call_operand.vmem [shape: f32[1,1,256], index: 1, kind: output, shape index: {}]
  $region1: #{squeeze.1} parent=0
    #allocation0 [shape = 'u8[8192]{0}', space=vmem, size = 0x2000, scoped, tag = 'scoped mem for output reshape']
    %s2 = smov 3
    %v3 = vld [vmem:[%s0] ss:$4 sm:%s2]
    %vm4 = vcmask 261120
    %5 = vst.msk [vmem:[#allocation0] ss:$8 sm:$0x3] %vm4, %v3
    %s6 = scalar_lea.vmem %s0, 3
    %s7 = smov 3
    %v8 = vld [vmem:[%s6] ss:$4 sm:%s7]
    %9 = vrot.lane.b32.xlu0 %v8, 96
    %v10 = vpop.permute.xlu0 %9
    %vm11 = vcmask 1048320
    %12 = vst.msk [vmem:[#allocation0] ss:$8 sm:$0x3] %vm11, %v10
    %s13 = scalar_lea.vmem %s0, 2
    %s14 = smov 3
    %v15 = vld [vmem:[%s13] ss:$4 sm:%s14]
    %16 = vrot.lane.b32.xlu0 %v15, 64
    %v17 = vpop.permute.xlu0 %16
    %vm18 = vcmask 785920
    %19 = vst.msk [vmem:[#allocation0] ss:$8 sm:$0x3] %vm18, %v17
    %s20 = scalar_lea.vmem %s0, 1
    %s21 = smov 3
    %v22 = vld [vmem:[%s20] ss:$4 sm:%s21]
    %23 = vrot.lane.b32.xlu0 %v22, 32
    %v24 = vpop.permute.xlu0 %23
    %vm25 = vcmask 523520
    %26 = vst.msk [vmem:[#allocation0] ss:$8 sm:$0x3] %vm25, %v24
    %s28 = ssub.s32 2, 1
    %v29 = vld [vmem:[#allocation0] sm:%s28]
    %s31 = ssub.s32 2, 1
    %32 = vst [vmem:[%s1] sm:%s31] %v29
    %s33 = scalar_lea.vmem [#allocation0], 8
    %v34 = vld [vmem:[%s33] sm:%s28]
    %s36 = ssub.s32 2, 1
    %s37 = scalar_lea.vmem %s1, 1
    %38 = vst [vmem:[%s37] sm:%s36] %v34

// kernel: positional_encoder_forward.1
$region0: #{positional_encoder_forward.1}
  #allocation0 [shape = 'u32[]', space=smem, size = 0x4, offset = 0x4, fixed_abs, tag = 'smem constant byte address 0x4 - core index']
  #allocation1 [shape = 'u32[72,128]{1,0:T(1,128)}', space=vmem, size = 0x9000, scoped, tag = 'internal scratch']
  %s0 = inlined_call_operand.vmem [shape: f32[2,1,256], index: 0, kind: input, shape index: {}]
  %s1 = inlined_call_operand.vmem [shape: f32[1,1,256], index: 1, kind: input, shape index: {}]
  %s2 = inlined_call_operand.vmem [shape: f32[2,1,256], index: 2, kind: output, shape index: {}]
  %s3 = sld [smem:[#allocation0]]
  $region41: #{positional_encoder_forward.1} parent=0
    _
  %s5 = ssub.s32 1, %s3
  %s6 = scalar_select 0, %s5, %s3
  loop: start=0, step=1, limit=4
  $region2: #{positional_encoder_forward.1} parent=0 // loop_pre_header
    _
  $region3: #{positional_encoder_forward.1} parent=0 // loop_header
    %s8 = sphi 0, %s12
    %p9 = scmp.ge.s32.totalorder %s8, 4
    %s15 = sphi 0, %s27
    %s16 = sphi 0, %s23
    %s17 = sphi 0, %s15
    %s18 = sphi 0, %s16
    %s19 = sphi 0, %s17
    %s20 = sphi 0, %s18
    %s32 = sphi 0, %s34
    %s35 = sphi 0, %s32
    %s36 = sphi 0, %s35
    %s52 = sphi 0, %s36
    %s58 = sphi 0, %s60
    %s61 = sphi 0, %s58
    %s62 = sphi 0, %s61
    %s78 = sphi 0, %s62
    %s86 = sphi 0, %s88
    %s89 = sphi 0, %s86
    %s90 = sphi 0, %s89
    %s106 = sphi 0, %s90
  $region4: #{positional_encoder_forward.1} parent=0 // loop_header_branch
    %11 = sbr.rel (%p9) target = $region8
  $region5: #{positional_encoder_forward.1} parent=0 // loop_body
    %s13 = ssub.s32 %s8, 1
    %s14 = ssub.s32 %s8, 2
    %s21 = sadd.s32 1, %s16
    %p22 = scmp.ge.s32.totalorder %s21, 2
    %s23 = scalar_select %p22, 0, %s21
    %s24 = sadd.s32 1, %s15
    %s25 = scalar_select %p22, %s24, %s15
    %p26 = scmp.ge.s32.totalorder %s25, 1
    %s27 = scalar_select %p26, 0, %s25
    %s28 = ssub.s32 %s16, %s23
    %s29 = ssub.s32 %s15, %s27
    %s30 = sor.u32 %s28, %s29
    %p31 = scmp.eq.s32.totalorder %s30, 0
    %s33 = sadd.s32 %s32, 1
    %s34 = scalar_select %p31, %s32, %s33
    %p37 = pneg %p31
    %p38 = scmp.eq.s32.totalorder %s8, 1
    %p39 = por %p37, %p38
    %p40 = scmp.ne.s32.totalorder %s32, %s35
    %p41 = scmp.eq.s32.totalorder %s8, 0
    %p42 = por %p40, %p41
    %p43 = scmp.ne.s32.totalorder %s32, %s35
    %p44 = scmp.eq.s32.totalorder %s13, 1
    %p45 = por %p43, %p44
    %p46 = scmp.ne.s32.totalorder %s35, %s36
    %p47 = scmp.eq.s32.totalorder %s13, 0
    %p48 = por %p46, %p47
    %p49 = scmp.ne.s32.totalorder %s35, %s36
    %p50 = scmp.eq.s32.totalorder %s14, 1
    %p51 = por %p49, %p50
    %p53 = scmp.ne.s32.totalorder %s36, %s52
    %p54 = scmp.eq.s32.totalorder %s14, 0
    %p55 = por %p53, %p54
    %s56 = ssub.s32 %s15, %s27
    %p57 = scmp.eq.s32.totalorder %s56, 0
    %s59 = sadd.s32 %s58, 1
    %s60 = scalar_select %p57, %s58, %s59
    %p63 = pneg %p57
    %p64 = scmp.eq.s32.totalorder %s8, 1
    %p65 = por %p63, %p64
    %p66 = scmp.ne.s32.totalorder %s58, %s61
    %p67 = scmp.eq.s32.totalorder %s8, 0
    %p68 = por %p66, %p67
    %p69 = scmp.ne.s32.totalorder %s58, %s61
    %p70 = scmp.eq.s32.totalorder %s13, 1
    %p71 = por %p69, %p70
    %p72 = scmp.ne.s32.totalorder %s61, %s62
    %p73 = scmp.eq.s32.totalorder %s13, 0
    %p74 = por %p72, %p73
    %p75 = scmp.ne.s32.totalorder %s61, %s62
    %p76 = scmp.eq.s32.totalorder %s14, 1
    %p77 = por %p75, %p76
    %p79 = scmp.ne.s32.totalorder %s62, %s78
    %p80 = scmp.eq.s32.totalorder %s14, 0
    %p81 = por %p79, %p80
    %s82 = ssub.s32 %s16, %s23
    %s83 = ssub.s32 %s15, %s27
    %s84 = sor.u32 %s82, %s83
    %p85 = scmp.eq.s32.totalorder %s84, 0
    %s87 = sadd.s32 %s86, 1
    %s88 = scalar_select %p85, %s86, %s87
    %p91 = pneg %p85
    %p92 = scmp.eq.s32.totalorder %s8, 1
    %p93 = por %p91, %p92
    %p94 = scmp.ne.s32.totalorder %s86, %s89
    %p95 = scmp.eq.s32.totalorder %s8, 0
    %p96 = por %p94, %p95
    %p97 = scmp.ne.s32.totalorder %s86, %s89
    %p98 = scmp.eq.s32.totalorder %s13, 1
    %p99 = por %p97, %p98
    %p100 = scmp.ne.s32.totalorder %s89, %s90
    %p101 = scmp.eq.s32.totalorder %s13, 0
    %p102 = por %p100, %p101
    %p103 = scmp.ne.s32.totalorder %s89, %s90
    %p104 = scmp.eq.s32.totalorder %s14, 1
    %p105 = por %p103, %p104
    %p107 = scmp.ne.s32.totalorder %s90, %s106
    %p108 = scmp.eq.s32.totalorder %s14, 0
    %p109 = por %p107, %p108
    %p110 = scmp.le.s32.totalorder 1, %s8
    %p111 = scmp.lt.s32.totalorder %s8, 3
    %p112 = pnand %p110, %p111
    %p113 = pneg %p112
    // Predicated region
    $region9: #{positional_encoder_forward.1} parent=5 // pred_check
      _
    $region10: #{positional_encoder_forward.1} parent=5 // pred_check_branch
      %115 = sbr.rel (%p112) target = $region12
    $region11: #{positional_encoder_forward.1} parent=5 // pred_region
      %s116 = ssub.s32 %s8, 1
      // Predicated region
      $region13: #{positional_encoder_forward.1} parent=11 // pred_check
        %p117 = pneg %p74
      $region14: #{positional_encoder_forward.1} parent=11 // pred_check_branch
        %119 = sbr.rel (%p117) target = $region16
      $region15: #{positional_encoder_forward.1} parent=11 // pred_region
        %p120 = scmp.lt.s32.totalorder %s17, 0
        %s121 = scalar_select %p120, %s17, 0
        %s122 = smul.addr %s121, 2
        %s123 = scalar_lea.vmem %s1, %s122
      $region16: #{positional_encoder_forward.1} parent=11 // pred_fallthru
        _
    $region12: #{positional_encoder_forward.1} parent=5 // pred_fallthru
      _
    %p124 = scmp.lt.s32.totalorder %s8, 2
    // Predicated region
    $region17: #{positional_encoder_forward.1} parent=5 // pred_check
      %p125 = pneg %p124
    $region18: #{positional_encoder_forward.1} parent=5 // pred_check_branch
      %127 = sbr.rel (%p125) target = $region20
    $region19: #{positional_encoder_forward.1} parent=5 // pred_region
      // Predicated region
      $region21: #{positional_encoder_forward.1} parent=19 // pred_check
        %p128 = pneg %p42
      $region22: #{positional_encoder_forward.1} parent=19 // pred_check_branch
        %130 = sbr.rel (%p128) target = $region24
      $region23: #{positional_encoder_forward.1} parent=19 // pred_region
        %p131 = scmp.lt.s32.totalorder %s16, 1
        %s132 = scalar_select %p131, %s16, 1
        %p133 = scmp.lt.s32.totalorder %s15, 0
        %s134 = scalar_select %p133, %s15, 0
        %s135 = smul.addr %s134, 2
        %s136 = smul.addr %s132, 2
        %s137 = sadd.s32 %s135, %s136
        %s138 = scalar_lea.vmem %s0, %s137
      $region24: #{positional_encoder_forward.1} parent=19 // pred_fallthru
        _
    $region20: #{positional_encoder_forward.1} parent=5 // pred_fallthru
      _
    %p139 = scmp.le.s32.totalorder 1, %s8
    %p140 = scmp.lt.s32.totalorder %s8, 3
    %p141 = pnand %p139, %p140
    %p142 = pneg %p141
    // Predicated region
    $region25: #{positional_encoder_forward.1} parent=5 // pred_check
      _
    $region26: #{positional_encoder_forward.1} parent=5 // pred_check_branch
      %144 = sbr.rel (%p141) target = $region28
    $region27: #{positional_encoder_forward.1} parent=5 // pred_region
      %s145 = ssub.s32 %s8, 1
      %p146 = scmp.lt.s32.totalorder %s18, 1
      %s147 = scalar_select %p146, %s18, 1
      %p148 = scmp.lt.s32.totalorder %s17, 0
      %s149 = scalar_select %p148, %s17, 0
      %s150 = smul.addr %s149, 2
      %s151 = smul.addr %s147, 2
      %s152 = sadd.s32 %s150, %s151
      %s153 = scalar_lea.vmem %s0, %s152
      %p154 = pneg %p48
      %p155 = pneg %p45
      %p156 = scmp.lt.s32.totalorder %s17, 0
      %s157 = scalar_select %p156, %s17, 0
      %s158 = smul.addr %s157, 2
      %s159 = scalar_lea.vmem %s1, %s158
      %p160 = pneg %p74
      %p161 = pneg %p71
      %p162 = pneg %p102
      %p163 = pneg %p99
      %p164 = scmp.lt.s32.totalorder %s18, 1
      %s165 = scalar_select %p164, %s18, 1
      %p166 = scmp.lt.s32.totalorder %s17, 0
      %s167 = scalar_select %p166, %s17, 0
      %s168 = smul.addr %s167, 2
      %s169 = smul.addr %s165, 2
      %s170 = sadd.s32 %s168, %s169
      %s171 = scalar_lea.vmem %s2, %s170
      %p172 = scmp.lt.s32.totalorder %s18, 1
      %s173 = scalar_select %p172, %s18, 1
      %p174 = scmp.lt.s32.totalorder %s17, 0
      %s175 = scalar_select %p174, %s17, 0
      %s176 = smul.addr %s175, 2
      %s177 = smul.addr %s173, 2
      %s178 = sadd.s32 %s176, %s177
      %s179 = scalar_lea.vmem %s0, %s178
      %p180 = scmp.lt.s32.totalorder %s17, 0
      %s181 = scalar_select %p180, %s17, 0
      %s182 = smul.addr %s181, 2
      %s183 = scalar_lea.vmem %s1, %s182
      %p184 = scmp.lt.s32.totalorder %s18, 1
      %s185 = scalar_select %p184, %s18, 1
      %p186 = scmp.lt.s32.totalorder %s17, 0
      %s187 = scalar_select %p186, %s17, 0
      %s188 = smul.addr %s187, 2
      %s189 = smul.addr %s185, 2
      %s190 = sadd.s32 %s188, %s189
      %s191 = scalar_lea.vmem %s2, %s190
      %v192 = vld [vmem:[%s179] sm:$0x3]
      %v193 = vmul.f32 %v192, 5.656854
      %v194 = vld [vmem:[%s183] sm:$0x3]
      %v195 = vadd.f32 %v193, %v194
      %v196 = vlaneseq
      %vm197 = vcmp.ge.s32.totalorder %v196, 0
      %vm198 = vcmp.lt.s32.totalorder %v196, 256
      %vm199 = vmand %vm197, %vm198
      %200 = vst.msk [vmem:[%s191] sm:$0x3] %vm199, %v195
      %p201 = scmp.lt.s32.totalorder %s18, 1
      %s202 = scalar_select %p201, %s18, 1
      %p203 = scmp.lt.s32.totalorder %s17, 0
      %s204 = scalar_select %p203, %s17, 0
      %s205 = smul.addr %s204, 2
      %s206 = smul.addr %s202, 2
      %s207 = sadd.s32 %s205, %s206
      %s208 = scalar_lea.vmem %s2, %s207
      // Predicated region
      $region29: #{positional_encoder_forward.1} parent=27 // pred_check
        %p209 = pneg %p99
      $region30: #{positional_encoder_forward.1} parent=27 // pred_check_branch
        %211 = sbr.rel (%p209) target = $region32
      $region31: #{positional_encoder_forward.1} parent=27 // pred_region
        _
      $region32: #{positional_encoder_forward.1} parent=27 // pred_fallthru
        _
    $region28: #{positional_encoder_forward.1} parent=5 // pred_fallthru
      _
    %p212 = scmp.le.s32.totalorder 2, %s8
    // Predicated region
    $region33: #{positional_encoder_forward.1} parent=5 // pred_check
      %p213 = pneg %p212
    $region34: #{positional_encoder_forward.1} parent=5 // pred_check_branch
      %215 = sbr.rel (%p213) target = $region36
    $region35: #{positional_encoder_forward.1} parent=5 // pred_region
      %s216 = ssub.s32 %s8, 2
      // Predicated region
      $region37: #{positional_encoder_forward.1} parent=35 // pred_check
        %p217 = pneg %p105
      $region38: #{positional_encoder_forward.1} parent=35 // pred_check_branch
        %219 = sbr.rel (%p217) target = $region40
      $region39: #{positional_encoder_forward.1} parent=35 // pred_region
        %p220 = scmp.lt.s32.totalorder %s20, 1
        %s221 = scalar_select %p220, %s20, 1
        %p222 = scmp.lt.s32.totalorder %s19, 0
        %s223 = scalar_select %p222, %s19, 0
        %s224 = smul.addr %s223, 2
        %s225 = smul.addr %s221, 2
        %s226 = sadd.s32 %s224, %s225
        %s227 = scalar_lea.vmem %s2, %s226
      $region40: #{positional_encoder_forward.1} parent=35 // pred_fallthru
        _
    $region36: #{positional_encoder_forward.1} parent=5 // pred_fallthru
      _
  $region6: #{positional_encoder_forward.1} parent=0 // loop_footer
    %s12 = sadd.s32 1, %s8
  $region7: #{positional_encoder_forward.1} parent=0 // loop_footer_branch
    %7 = sbr.rel target = $region3
  $region8: #{positional_encoder_forward.1} parent=0 // loop_exit
    _

</llo_original>
